<compile_context>
chip_gen: v7x
topology: tpu7x:2x2x1
jax: 0.10.0
libtpu: 0.0.40
codegen_flags: <defaults>
</compile_context>

<pallas_src>
import functools

import jax
import jax.numpy as jnp
from jax.experimental import pallas as pl
from jax.experimental.pallas import tpu as pltpu


def _round_up(n, m):
    return ((n + m - 1) // m) * m


def _policy_net_kernel(x_ref, p_ref, out_ref, *,
                       obs_dim, h1_dim, h2_dim, a_dim, r1, r2, r3):
    x = x_ref[...]                                     # (B, obs)

    # Single packed-param slab; every block starts at an 8-row, lane-0 offset,
    # so these static slices are tile-aligned views/loads.
    w1 = p_ref[0:obs_dim, :h1_dim]                     # (obs, H1)
    w2 = p_ref[r1:r1 + h1_dim, :h2_dim]                # (H1, H2)
    wh = p_ref[r1 + r2:r1 + r2 + h2_dim, :]            # (H2, 128)  mean|log_std, lane-dense
    brow = r1 + r2 + r3
    b1 = p_ref[brow:brow + 1, :h1_dim]                 # (1, H1)
    b2 = p_ref[brow + 1:brow + 2, :h2_dim]             # (1, H2)
    bh = p_ref[brow + 2:brow + 3, :]                   # (1, 128)

    # fc1 -> relu
    h1 = jnp.dot(x, w1, preferred_element_type=jnp.float32) + b1
    h1 = jnp.maximum(h1, 0.0)

    # fc2 -> relu
    h2 = jnp.dot(h1, w2, preferred_element_type=jnp.float32) + b2
    h2 = jnp.maximum(h2, 0.0)

    # Fused heads: lanes [0, A) = mean, lanes [A, 2A) = log_std, rest zero pad.
    head = jnp.dot(h2, wh, preferred_element_type=jnp.float32) + bh   # (B, 128)

    lane = jax.lax.broadcasted_iota(jnp.int32, head.shape, 1)
    # exp on the mean lanes is harmless (clipped to [-20, 2] first, then
    # discarded by the where); padding lanes (>= 2A) become exp(0)=1 and are
    # sliced away by the caller.
    std_branch = jnp.exp(jnp.clip(head, -20.0, 2.0))
    out = jnp.where(lane >= a_dim, std_branch, head)
    out_ref[...] = out.astype(out_ref.dtype)           # full-128-lane unmasked store


def pack_params(w1, b1, w2, b2, wm, bm, ws, bs):
    """Pack PyTorch-equivalent params ((in,out) weights, (1,out) biases) into a
    single lane-dense f32 slab + static dims for the kernel."""
    obs_dim, h1_dim = w1.shape
    h2_dim = w2.shape[1]
    a_dim = wm.shape[1]

    # Lane width: at least 128 so the fused head / output slab is lane-dense.
    width = max(_round_up(h1_dim, 128), _round_up(h2_dim, 128), 128)
    assert 2 * a_dim <= width, "2*action_dims must fit in the padded lane width"

    # Each block padded to an 8-row multiple so the next block starts aligned.
    r1 = _round_up(obs_dim, 8)
    r2 = _round_up(h1_dim, 8)
    r3 = _round_up(h2_dim, 8)

    def pad_block(a, rows):
        a = jnp.asarray(a, jnp.float32)
        return jnp.pad(a, ((0, rows - a.shape[0]), (0, width - a.shape[1])))

    wh = jnp.concatenate([wm, ws], axis=1)                               # (H2, 2A)
    bh = jnp.concatenate([bm.reshape(1, -1), bs.reshape(1, -1)], axis=1)  # (1, 2A)

    bias_block = jnp.concatenate([
        pad_block(b1.reshape(1, -1), 1),
        pad_block(b2.reshape(1, -1), 1),
        pad_block(bh, 1),
    ], axis=0)
    bias_block = jnp.pad(bias_block, ((0, 8 - 3), (0, 0)))               # 8 rows

    params = jnp.concatenate([
        pad_block(w1, r1),        # rows [0, r1)
        pad_block(w2, r2),        # rows [r1, r1+r2)
        pad_block(wh, r3),        # rows [r1+r2, r1+r2+r3), lane-dense head
        bias_block,               # rows [r1+r2+r3, +8): b1 / b2 / bh
    ], axis=0)

    dims = dict(obs_dim=obs_dim, h1_dim=h1_dim, h2_dim=h2_dim, a_dim=a_dim,
                r1=r1, r2=r2, r3=r3)
    return params, dims, width


def policy_network_forward(x, packed_params):
    """x: (B, obs_dims) float32.  Returns (mean, std), each (B, action_dims).

    Perf note: batch rollouts so B >= 8 (ideally 128+) per call -- this kernel's
    cost is dominated by fixed launch/DMA overhead, not compute.
    """
    params, dims, width = packed_params
    a_dim = dims["a_dim"]
    B = x.shape[0]

    vmem = pl.BlockSpec(memory_space=pltpu.MemorySpace.VMEM)

    out = pl.pallas_call(
        functools.partial(_policy_net_kernel, **dims),
        out_shape=jax.ShapeDtypeStruct((B, width), jnp.float32),
        in_specs=[vmem, vmem],
        out_specs=vmem,
    )(x, params)

    return out[:, :a_dim], out[:, a_dim:2 * a_dim]


def init_params(key, obs_dims, action_dims, hidden1, hidden2):
    """Deterministic init mimicking PyTorch Linear default (uniform +/- 1/sqrt(fan_in))."""
    def linear(k, fan_in, fan_out):
        kw, kb = jax.random.split(k)
        bound = 1.0 / jnp.sqrt(jnp.float32(fan_in))
        w = jax.random.uniform(kw, (fan_in, fan_out), jnp.float32, -bound, bound)
        b = jax.random.uniform(kb, (1, fan_out), jnp.float32, -bound, bound)
        return w, b

    k1, k2, k3, k4 = jax.random.split(key, 4)
    w1, b1 = linear(k1, obs_dims, hidden1)
    w2, b2 = linear(k2, hidden1, hidden2)
    wm, bm = linear(k3, hidden2, action_dims)
    ws, bs = linear(k4, hidden2, action_dims)
    return (w1, b1, w2, b2, wm, bm, ws, bs)


if __name__ == "__main__":
    key = jax.random.PRNGKey(0)
    kx, kp = jax.random.split(key)

    batch = 2          # demo shape; batch >= 8 (ideally 128+) is the real lever
    obs_dims = 8
    action_dims = 4
    hidden1 = 32
    hidden2 = 32

    x = jax.random.normal(kx, (batch, obs_dims), jnp.float32)
    raw = init_params(kp, obs_dims, action_dims, hidden1, hidden2)
    packed = pack_params(*raw)   # pack once outside the RL step loop, reuse

    mean, std = policy_network_forward(x, packed)
    jax.block_until_ready((mean, std))

    # Pure-JAX reference check (matches the PyTorch forward exactly).
    w1, b1, w2, b2, wm, bm, ws, bs = raw
    h1 = jnp.maximum(x @ w1 + b1, 0.0)
    h2 = jnp.maximum(h1 @ w2 + b2, 0.0)
    mean_ref = h2 @ wm + bm
    std_ref = jnp.exp(jnp.clip(h2 @ ws + bs, -20.0, 2.0))

    assert mean.shape == (batch, action_dims) and std.shape == (batch, action_dims)
    assert jnp.allclose(mean, mean_ref, atol=1e-5)
    assert jnp.allclose(std, std_ref, atol=1e-5)

    print("KERNEL_OK")
</pallas_src>

<mosaic_0001>
module attributes {stable_mosaic.version = 11 : i64} {
  func.func @_policy_net_kernel(%arg0: memref<2x8xf32, #tpu.memory_space<vmem>>, %arg1: memref<80x128xf32, #tpu.memory_space<vmem>>, %arg2: memref<2x128xf32, #tpu.memory_space<vmem>>) attributes {dimension_semantics = [], scalar_prefetch = 0 : i64, scratch_operands = 0 : i64, tpu.core_type = #tpu.core_type<tc>} {
    %c0 = arith.constant 0 : index
    %c0_0 = arith.constant 0 : index
    %0 = vector.load %arg0[%c0, %c0_0] : memref<2x8xf32, #tpu.memory_space<vmem>>, vector<2x8xf32>
    %c0_1 = arith.constant 0 : index
    %c0_2 = arith.constant 0 : index
    %1 = vector.load %arg1[%c0_1, %c0_2] : memref<80x128xf32, #tpu.memory_space<vmem>>, vector<8x32xf32>
    %c8 = arith.constant 8 : index
    %c0_3 = arith.constant 0 : index
    %2 = vector.load %arg1[%c8, %c0_3] : memref<80x128xf32, #tpu.memory_space<vmem>>, vector<32x32xf32>
    %c40 = arith.constant 40 : index
    %c0_4 = arith.constant 0 : index
    %3 = vector.load %arg1[%c40, %c0_4] : memref<80x128xf32, #tpu.memory_space<vmem>>, vector<32x128xf32>
    %c72 = arith.constant 72 : index
    %c0_5 = arith.constant 0 : index
    %4 = vector.load %arg1[%c72, %c0_5] : memref<80x128xf32, #tpu.memory_space<vmem>>, vector<1x32xf32>
    %c73 = arith.constant 73 : index
    %c0_6 = arith.constant 0 : index
    %5 = vector.load %arg1[%c73, %c0_6] : memref<80x128xf32, #tpu.memory_space<vmem>>, vector<1x32xf32>
    %c74 = arith.constant 74 : index
    %c0_7 = arith.constant 0 : index
    %6 = vector.load %arg1[%c74, %c0_7] : memref<80x128xf32, #tpu.memory_space<vmem>>, vector<1x128xf32>
    %cst = arith.constant dense<0.000000e+00> : vector<2x32xf32>
    %7 = tpu.matmul %0, %1, %cst {dimension_numbers = #tpu.dot_dimension_numbers<[1], [0], [0], [1], [0, 0, 1, 1], [], []>} : vector<2x8xf32>, vector<8x32xf32>, vector<2x32xf32> -> vector<2x32xf32>
    %8 = vector.broadcast %4 : vector<1x32xf32> to vector<2x32xf32>
    %9 = arith.addf %7, %8 : vector<2x32xf32>
    %cst_8 = arith.constant 0.000000e+00 : f32
    %10 = vector.broadcast %cst_8 : f32 to vector<2x32xf32>
    %11 = arith.maximumf %9, %10 : vector<2x32xf32>
    %cst_9 = arith.constant dense<0.000000e+00> : vector<2x32xf32>
    %12 = tpu.matmul %11, %2, %cst_9 {dimension_numbers = #tpu.dot_dimension_numbers<[1], [0], [0], [1], [0, 0, 1, 1], [], []>} : vector<2x32xf32>, vector<32x32xf32>, vector<2x32xf32> -> vector<2x32xf32>
    %13 = vector.broadcast %5 : vector<1x32xf32> to vector<2x32xf32>
    %14 = arith.addf %12, %13 : vector<2x32xf32>
    %cst_10 = arith.constant 0.000000e+00 : f32
    %15 = vector.broadcast %cst_10 : f32 to vector<2x32xf32>
    %16 = arith.maximumf %14, %15 : vector<2x32xf32>
    %cst_11 = arith.constant dense<0.000000e+00> : vector<2x128xf32>
    %17 = tpu.matmul %16, %3, %cst_11 {dimension_numbers = #tpu.dot_dimension_numbers<[1], [0], [0], [1], [0, 0, 1, 1], [], []>} : vector<2x32xf32>, vector<32x128xf32>, vector<2x128xf32> -> vector<2x128xf32>
    %18 = vector.broadcast %6 : vector<1x128xf32> to vector<2x128xf32>
    %19 = arith.addf %17, %18 : vector<2x128xf32>
    %20 = tpu.iota {dimensions = array<i32: 1>} : vector<2x128xi32>
    %cst_12 = arith.constant -2.000000e+01 : f32
    %cst_13 = arith.constant 2.000000e+00 : f32
    %21 = vector.broadcast %cst_12 : f32 to vector<2x128xf32>
    %22 = arith.maximumf %21, %19 : vector<2x128xf32>
    %23 = vector.broadcast %cst_13 : f32 to vector<2x128xf32>
    %24 = arith.minimumf %23, %22 : vector<2x128xf32>
    %25 = math.exp %24 : vector<2x128xf32>
    %c4_i32 = arith.constant 4 : i32
    %26 = vector.broadcast %c4_i32 : i32 to vector<2x128xi32>
    %27 = arith.cmpi sge, %20, %26 : vector<2x128xi32>
    %28 = arith.select %27, %25, %19 : vector<2x128xi1>, vector<2x128xf32>
    %c0_14 = arith.constant 0 : index
    %c0_15 = arith.constant 0 : index
    %29 = vector.load %arg2[%c0_14, %c0_15] : memref<2x128xf32, #tpu.memory_space<vmem>>, vector<2x128xf32>
    tpu.vector_store %arg2[%c0_14, %c0_15], %28 {strides = array<i32>} : memref<2x128xf32, #tpu.memory_space<vmem>>, vector<2x128xf32>,
    return
  }
}

</mosaic_0001>

<llo_original>
// kernel: tpu_custom_call.1
$region0: #{tpu_custom_call.1}
  #allocation0 [shape = 'u32[]', space=smem, size = 0x4, offset = 0x4, fixed_abs, tag = 'smem constant byte address 0x4 - core index']
  #allocation1 [shape = 'u32[144,128]{1,0:T(1,128)}', space=vmem, size = 0x12000, scoped, tag = 'internal scratch']
  %s0 = inlined_call_operand.hbm [shape: f32[2,8], index: 0, kind: input, shape index: {}]
  %s1 = inlined_call_operand.hbm [shape: f32[80,128], index: 1, kind: input, shape index: {}]
  %s2 = inlined_call_operand.hbm [shape: f32[2,128], index: 2, kind: output, shape index: {}]
  %s3 = sld [smem:[#allocation0]]
  $region26: #{tpu_custom_call.1} parent=0
    _
  %s5 = ssub.s32 1, %s3
  %s6 = scalar_select 0, %s5, %s3
  $region1: #{tpu_custom_call.1} parent=0
    #allocation2 [shape = 'u8[1024]{0}', space=vmem, size = 0x400, scoped, tag = 'input window, operand 0, single buffered']
    #allocation3 [shape = 's32[1]{0}', space=sflag, size = 0x4, scoped, tag = 'scoped memory for tpu_custom_call.1']
    #allocation4 [shape = 's32[1]{0}', space=sflag, size = 0x4, scoped, tag = 'scoped memory for tpu_custom_call.1']
    #allocation5 [shape = 'u8[40960]{0}', space=vmem, size = 0xa000, scoped, tag = 'input window, operand 1, single buffered']
    #allocation6 [shape = 's32[1]{0}', space=sflag, size = 0x4, scoped, tag = 'scoped memory for tpu_custom_call.1']
    #allocation7 [shape = 'u8[1024]{0}', space=vmem, size = 0x400, scoped, tag = 'output window, operand 0, single buffered']
    %7 = vsyncpa [#allocation3], 0
    %8 = vsyncpa [#allocation6], 0
    %9 = vsyncpa [#allocation4], 0
    // Predicated region
    $region2: #{tpu_custom_call.1} parent=1 // pred_check
      _
    $region3: #{tpu_custom_call.1} parent=1 // pred_check_branch
      %11 = sbr.rel (0) target = $region5
    $region4: #{tpu_custom_call.1} parent=1 // pred_region
      %s13 = ssub.s32 32, 32
      %14 = vsyncadd [#allocation3], %s13
      %s16 = sshll.u32 [#allocation2], 4
      %s17 = int_to_ptr.vmem [resolvable:$true] %s16
      %19 = dma.hbm_to_vmem [thread:$0]  %s0, 32, %s17, [#allocation3]
    $region5: #{tpu_custom_call.1} parent=1 // pred_fallthru
      _
    // Predicated region
    $region6: #{tpu_custom_call.1} parent=1 // pred_check
      _
    $region7: #{tpu_custom_call.1} parent=1 // pred_check_branch
      %21 = sbr.rel (0) target = $region9
    $region8: #{tpu_custom_call.1} parent=1 // pred_region
      %s23 = ssub.s32 1280, 1280
      %24 = vsyncadd [#allocation6], %s23
      %s25 = sshll.u32 [#allocation5], 4
      %s26 = int_to_ptr.vmem [resolvable:$true] %s25
      %31 = dma.hbm_to_vmem [thread:$0]  %s1, 1280, %s26, [#allocation6], 128, 128, 8
    $region9: #{tpu_custom_call.1} parent=1 // pred_fallthru
      _
    // Predicated region
    $region10: #{tpu_custom_call.1} parent=1 // pred_check
      _
    $region11: #{tpu_custom_call.1} parent=1 // pred_check_branch
      %33 = sbr.rel (0) target = $region13
    $region12: #{tpu_custom_call.1} parent=1 // pred_region
      %34 = dma.done [#allocation3], 32
    $region13: #{tpu_custom_call.1} parent=1 // pred_fallthru
      _
    // Predicated region
    $region14: #{tpu_custom_call.1} parent=1 // pred_check
      _
    $region15: #{tpu_custom_call.1} parent=1 // pred_check_branch
      %36 = sbr.rel (0) target = $region17
    $region16: #{tpu_custom_call.1} parent=1 // pred_region
      %37 = dma.done [#allocation6], 1280
    $region17: #{tpu_custom_call.1} parent=1 // pred_fallthru
      _
    %v38 = vld [vmem:[#allocation2] sm:$0x3]
    %v39 = vld [vmem:[#allocation5] sm:$0xff]
    %v40 = vld [vmem:[#allocation5 + $0x8] sm:$0xff]
    %v41 = vld [vmem:[#allocation5 + $0x10] sm:$0xff]
    %v42 = vld [vmem:[#allocation5 + $0x18] sm:$0xff]
    %v43 = vld [vmem:[#allocation5 + $0x20] sm:$0xff]
    %v44 = vld [vmem:[#allocation5 + $0x28] sm:$0xff]
    %v45 = vld [vmem:[#allocation5 + $0x30] sm:$0xff]
    %v46 = vld [vmem:[#allocation5 + $0x38] sm:$0xff]
    %v47 = vld [vmem:[#allocation5 + $0x40] sm:$0xff]
    %v48 = vld [vmem:[#allocation5 + $0x48] sm:$0x1]
    %v49 = vld [vmem:[#allocation5 + $0x49] sm:$0x1]
    %v50 = vld [vmem:[#allocation5 + $0x4a] sm:$0x1]
    %v51 = vlaneseq
    %v52 = vshrl.u32 %v51, 7
    %v53 = vsub.s32 0, %v52
    %v54 = vrot.slane %v48, %v53
    %vm55 = vcmask 64512
    %v57 = vsel %vm55, %v38, 0
    %59 = vmatprep.subr.mxu0 0.0
    %60 = vmatpush1.msra.mxu0 %v39
    %61 = vmatprep.subr.mxu0 0.0
    %62 = vmatpush1.msra.mxu0 0.0
    %63 = vmatprep.subr.mxu0 0.0
    %64 = vmatpush1.msra.mxu0 0.0
    %65 = vmatprep.subr.mxu0 0.0
    %66 = vmatpush1.msra.mxu0 0.0
    %67 = vmatprep.subr.mxu0 0.0
    %68 = vmatpush1.msra.mxu0 0.0
    %69 = vmatprep.subr.mxu0 0.0
    %70 = vmatpush1.msra.mxu0 0.0
    %71 = vmatprep.subr.mxu0 0.0
    %72 = vmatpush1.msra.mxu0 0.0
    %73 = vmatprep.subr.mxu0 0.0
    %74 = vmatpush1.msra.mxu0 0.0
    %75 = vmatprep.subr.mxu0 0.0
    %76 = vmatpush1.msra.mxu0 0.0
    %77 = vmatprep.subr.mxu0 0.0
    %78 = vmatpush1.msra.mxu0 0.0
    %79 = vmatprep.subr.mxu0 0.0
    %80 = vmatpush1.msra.mxu0 0.0
    %81 = vmatprep.subr.mxu0 0.0
    %82 = vmatpush1.msra.mxu0 0.0
    %83 = vmatprep.subr.mxu0 0.0
    %84 = vmatpush1.msra.mxu0 0.0
    %85 = vmatprep.subr.mxu0 0.0
    %86 = vmatpush1.msra.mxu0 0.0
    %87 = vmatprep.subr.mxu0 0.0
    %88 = vmatpush1.msra.mxu0 0.0
    %89 = vmatprep.subr.mxu0 0.0
    %90 = vmatpush1.msra.mxu0 0.0
    %91 = vmatprep.subr.mxu0 0.0
    %92 = vmatpush1.msra.mxu0 0.0
    %93 = vmatprep.subr.mxu0 0.0
    %94 = vmatpush1.msra.mxu0 0.0
    %95 = vmatprep.subr.mxu0 0.0
    %96 = vmatpush1.msra.mxu0 0.0
    %97 = vmatprep.subr.mxu0 0.0
    %98 = vmatpush1.msra.mxu0 0.0
    %99 = vmatprep.subr.mxu0 0.0
    %100 = vmatpush1.msra.mxu0 0.0
    %101 = vmatprep.subr.mxu0 0.0
    %102 = vmatpush1.msra.mxu0 0.0
    %103 = vmatprep.subr.mxu0 0.0
    %104 = vmatpush1.msra.mxu0 0.0
    %105 = vmatprep.subr.mxu0 0.0
    %106 = vmatpush1.msra.mxu0 0.0
    %107 = vmatprep.subr.mxu0 0.0
    %108 = vmatpush1.msra.mxu0 0.0
    %109 = vmatprep.subr.mxu0 0.0
    %110 = vmatpush1.msra.mxu0 0.0
    %111 = vmatprep.subr.mxu0 0.0
    %112 = vmatpush1.msra.mxu0 0.0
    %113 = vmatprep.subr.mxu0 0.0
    %114 = vmatpush1.msra.mxu0 0.0
    %115 = vmatprep.subr.mxu0 0.0
    %116 = vmatpush1.msra.mxu0 0.0
    %117 = vmatprep.subr.mxu0 0.0
    %118 = vmatpush1.msra.mxu0 0.0
    %119 = vmatprep.subr.mxu0 0.0
    %120 = vmatpush1.msra.mxu0 0.0
    %121 = vmatprep.subr.mxu0 0.0
    %122 = vmatpush1.msra.mxu0 0.0
    %123 = vmatprep.mubr.f32.mxu0 0.0
    %124 = vmatmul.mubr.f32.gmra.mrb[0].mxu0 %v57
    %v125 = vpop.f32.mrb[0].mxu0
    %v126 = vadd.f32 %v54, %v125
    %v127 = vpop.f32.mrb[0].mxu0
    %128 = vdwg.mxu0
    %v129 = vmax.f32 %v126, 0.0
    %v130 = vlaneseq
    %v131 = vshrl.u32 %v130, 7
    %v132 = vsub.s32 0, %v131
    %v133 = vrot.slane %v49, %v132
    %vm134 = vcmask 261120
    %v136 = vsel %vm134, %v129, 0
    %138 = vmatprep.subr.mxu0 0.0
    %139 = vmatpush1.msra.mxu0 %v40
    %140 = vmatprep.subr.mxu0 0.0
    %141 = vmatpush1.msra.mxu0 %v41
    %142 = vmatprep.subr.mxu0 0.0
    %143 = vmatpush1.msra.mxu0 %v42
    %144 = vmatprep.subr.mxu0 0.0
    %145 = vmatpush1.msra.mxu0 %v43
    %146 = vmatprep.subr.mxu0 0.0
    %147 = vmatpush1.msra.mxu0 0.0
    %148 = vmatprep.subr.mxu0 0.0
    %149 = vmatpush1.msra.mxu0 0.0
    %150 = vmatprep.subr.mxu0 0.0
    %151 = vmatpush1.msra.mxu0 0.0
    %152 = vmatprep.subr.mxu0 0.0
    %153 = vmatpush1.msra.mxu0 0.0
    %154 = vmatprep.subr.mxu0 0.0
    %155 = vmatpush1.msra.mxu0 0.0
    %156 = vmatprep.subr.mxu0 0.0
    %157 = vmatpush1.msra.mxu0 0.0
    %158 = vmatprep.subr.mxu0 0.0
    %159 = vmatpush1.msra.mxu0 0.0
    %160 = vmatprep.subr.mxu0 0.0
    %161 = vmatpush1.msra.mxu0 0.0
    %162 = vmatprep.subr.mxu0 0.0
    %163 = vmatpush1.msra.mxu0 0.0
    %164 = vmatprep.subr.mxu0 0.0
    %165 = vmatpush1.msra.mxu0 0.0
    %166 = vmatprep.subr.mxu0 0.0
    %167 = vmatpush1.msra.mxu0 0.0
    %168 = vmatprep.subr.mxu0 0.0
    %169 = vmatpush1.msra.mxu0 0.0
    %170 = vmatprep.subr.mxu0 0.0
    %171 = vmatpush1.msra.mxu0 0.0
    %172 = vmatprep.subr.mxu0 0.0
    %173 = vmatpush1.msra.mxu0 0.0
    %174 = vmatprep.subr.mxu0 0.0
    %175 = vmatpush1.msra.mxu0 0.0
    %176 = vmatprep.subr.mxu0 0.0
    %177 = vmatpush1.msra.mxu0 0.0
    %178 = vmatprep.subr.mxu0 0.0
    %179 = vmatpush1.msra.mxu0 0.0
    %180 = vmatprep.subr.mxu0 0.0
    %181 = vmatpush1.msra.mxu0 0.0
    %182 = vmatprep.subr.mxu0 0.0
    %183 = vmatpush1.msra.mxu0 0.0
    %184 = vmatprep.subr.mxu0 0.0
    %185 = vmatpush1.msra.mxu0 0.0
    %186 = vmatprep.subr.mxu0 0.0
    %187 = vmatpush1.msra.mxu0 0.0
    %188 = vmatprep.subr.mxu0 0.0
    %189 = vmatpush1.msra.mxu0 0.0
    %190 = vmatprep.subr.mxu0 0.0
    %191 = vmatpush1.msra.mxu0 0.0
    %192 = vmatprep.subr.mxu0 0.0
    %193 = vmatpush1.msra.mxu0 0.0
    %194 = vmatprep.subr.mxu0 0.0
    %195 = vmatpush1.msra.mxu0 0.0
    %196 = vmatprep.subr.mxu0 0.0
    %197 = vmatpush1.msra.mxu0 0.0
    %198 = vmatprep.subr.mxu0 0.0
    %199 = vmatpush1.msra.mxu0 0.0
    %200 = vmatprep.subr.mxu0 0.0
    %201 = vmatpush1.msra.mxu0 0.0
    %202 = vmatprep.mubr.f32.mxu0 0.0
    %203 = vmatmul.mubr.f32.gmra.mrb[0].mxu0 %v136
    %v204 = vpop.f32.mrb[0].mxu0
    %v205 = vadd.f32 %v133, %v204
    %v206 = vpop.f32.mrb[0].mxu0
    %207 = vdwg.mxu0
    %v208 = vmax.f32 %v205, 0.0
    %v209 = vlaneseq
    %v210 = vshrl.u32 %v209, 7
    %v211 = vsub.s32 0, %v210
    %v212 = vrot.slane %v50, %v211
    %v214 = vsel %vm134, %v208, 0
    %216 = vmatprep.subr.mxu0 0.0
    %217 = vmatpush1.msra.mxu0 %v44
    %218 = vmatprep.subr.mxu0 0.0
    %219 = vmatpush1.msra.mxu0 %v45
    %220 = vmatprep.subr.mxu0 0.0
    %221 = vmatpush1.msra.mxu0 %v46
    %222 = vmatprep.subr.mxu0 0.0
    %223 = vmatpush1.msra.mxu0 %v47
    %224 = vmatprep.subr.mxu0 0.0
    %225 = vmatpush1.msra.mxu0 0.0
    %226 = vmatprep.subr.mxu0 0.0
    %227 = vmatpush1.msra.mxu0 0.0
    %228 = vmatprep.subr.mxu0 0.0
    %229 = vmatpush1.msra.mxu0 0.0
    %230 = vmatprep.subr.mxu0 0.0
    %231 = vmatpush1.msra.mxu0 0.0
    %232 = vmatprep.subr.mxu0 0.0
    %233 = vmatpush1.msra.mxu0 0.0
    %234 = vmatprep.subr.mxu0 0.0
    %235 = vmatpush1.msra.mxu0 0.0
    %236 = vmatprep.subr.mxu0 0.0
    %237 = vmatpush1.msra.mxu0 0.0
    %238 = vmatprep.subr.mxu0 0.0
    %239 = vmatpush1.msra.mxu0 0.0
    %240 = vmatprep.subr.mxu0 0.0
    %241 = vmatpush1.msra.mxu0 0.0
    %242 = vmatprep.subr.mxu0 0.0
    %243 = vmatpush1.msra.mxu0 0.0
    %244 = vmatprep.subr.mxu0 0.0
    %245 = vmatpush1.msra.mxu0 0.0
    %246 = vmatprep.subr.mxu0 0.0
    %247 = vmatpush1.msra.mxu0 0.0
    %248 = vmatprep.subr.mxu0 0.0
    %249 = vmatpush1.msra.mxu0 0.0
    %250 = vmatprep.subr.mxu0 0.0
    %251 = vmatpush1.msra.mxu0 0.0
    %252 = vmatprep.subr.mxu0 0.0
    %253 = vmatpush1.msra.mxu0 0.0
    %254 = vmatprep.subr.mxu0 0.0
    %255 = vmatpush1.msra.mxu0 0.0
    %256 = vmatprep.subr.mxu0 0.0
    %257 = vmatpush1.msra.mxu0 0.0
    %258 = vmatprep.subr.mxu0 0.0
    %259 = vmatpush1.msra.mxu0 0.0
    %260 = vmatprep.subr.mxu0 0.0
    %261 = vmatpush1.msra.mxu0 0.0
    %262 = vmatprep.subr.mxu0 0.0
    %263 = vmatpush1.msra.mxu0 0.0
    %264 = vmatprep.subr.mxu0 0.0
    %265 = vmatpush1.msra.mxu0 0.0
    %266 = vmatprep.subr.mxu0 0.0
    %267 = vmatpush1.msra.mxu0 0.0
    %268 = vmatprep.subr.mxu0 0.0
    %269 = vmatpush1.msra.mxu0 0.0
    %270 = vmatprep.subr.mxu0 0.0
    %271 = vmatpush1.msra.mxu0 0.0
    %272 = vmatprep.subr.mxu0 0.0
    %273 = vmatpush1.msra.mxu0 0.0
    %274 = vmatprep.subr.mxu0 0.0
    %275 = vmatpush1.msra.mxu0 0.0
    %276 = vmatprep.subr.mxu0 0.0
    %277 = vmatpush1.msra.mxu0 0.0
    %278 = vmatprep.subr.mxu0 0.0
    %279 = vmatpush1.msra.mxu0 0.0
    %280 = vmatprep.mubr.f32.mxu0 0.0
    %281 = vmatmul.mubr.f32.gmra.mrb[0].mxu0 %v214
    %v282 = vpop.f32.mrb[0].mxu0
    %v283 = vadd.f32 %v212, %v282
    %v284 = vpop.f32.mrb[0].mxu0
    %285 = vdwg.mxu0
    %v286 = vlaneseq
    %v287 = vand.u32 %v286, 127
    %v288 = vmax.f32 %v283, -20.0
    %v289 = vmin.f32 %v288, 2.0
    %v290 = vmul.f32 %v289, 1.442695
    %v291 = vpow.pop %v290
    %vm292 = vcmp.ge.s32.totalorder %v287, 4
    %v293 = vsel %vm292, %v291, %v283
    %294 = vst [vmem:[#allocation7] sm:$0x3] %v293
    // Predicated region
    $region18: #{tpu_custom_call.1} parent=1 // pred_check
      _
    $region19: #{tpu_custom_call.1} parent=1 // pred_check_branch
      %296 = sbr.rel (0) target = $region21
    $region20: #{tpu_custom_call.1} parent=1 // pred_region
      %s298 = ssub.s32 32, 32
      %299 = vsyncadd [#allocation4], %s298
      %s301 = sshll.u32 [#allocation7], 4
      %s302 = int_to_ptr.vmem [resolvable:$true] %s301
      %304 = dma.vmem_to_hbm [thread:$0]  %s302, 32, %s2, [#allocation4]
    $region21: #{tpu_custom_call.1} parent=1 // pred_fallthru
      _
    // Predicated region
    $region22: #{tpu_custom_call.1} parent=1 // pred_check
      _
    $region23: #{tpu_custom_call.1} parent=1 // pred_check_branch
      %306 = sbr.rel (0) target = $region25
    $region24: #{tpu_custom_call.1} parent=1 // pred_region
      %307 = dma.done [#allocation4], 32
    $region25: #{tpu_custom_call.1} parent=1 // pred_fallthru
      _
    %308 = vsyncpa [#allocation3], 1
    %309 = vsyncpa [#allocation6], 1
    %310 = vsyncpa [#allocation4], 1

</llo_original>
